<compile_context>
chip_gen: v7x
topology: tpu7x:2x2x1
jax: 0.10.0
libtpu: 0.0.40
codegen_flags: <defaults>
</compile_context>

<pallas_src>
import jax
import jax.numpy as jnp
from jax import lax
from jax.experimental import pallas as pl
from jax.experimental.pallas import tpu as pltpu


def _round_up(x, m):
    return ((x + m - 1) // m) * m


def _make_proxynca_kernel(C, smoothing_const, exclude_positive, TB, TC):
    # Smoothed labels: Tsm[i, c] = (1 - s) if c == T[i] else s / (C - 1).
    # (C == 1 with s > 0 would divide by zero in the PyTorch reference too;
    #  we define the off-class weight as 0 in that degenerate case.)
    w_pos = 1.0 - smoothing_const
    w_rest = (smoothing_const / (C - 1)) if C > 1 else 0.0

    def kernel(lab_ref, x_ref, pt_ref, out_ref, xn_ref, denom_ref, tsmd_ref):
        c_idx = pl.program_id(1)

        @pl.when(c_idx == 0)
        def _init():
            # Normalize this X tile once per B-tile (cached across the class
            # axis) and reset the per-row running accumulators.
            X = x_ref[...].astype(jnp.float32)
            inv_x = lax.rsqrt(jnp.maximum(
                jnp.sum(X * X, axis=-1, keepdims=True), 1e-24))
            xn_ref[...] = X * (3.0 * inv_x)
            denom_ref[...] = jnp.zeros_like(denom_ref)
            tsmd_ref[...] = jnp.zeros_like(tsmd_ref)

        Xn = xn_ref[...]                       # (TB, E) f32, ||row|| = 3
        PnT = pt_ref[...]                      # (E, TC) f32, pre-normalized * 3
        # ||Xn_i||^2 = ||Pn_c||^2 = 9  =>  D = 18 - 2 * Xn @ Pn^T  (clamp >= 0)
        xp = jnp.dot(Xn, PnT, preferred_element_type=jnp.float32)   # MXU
        D = jnp.maximum(18.0 - 2.0 * xp, 0.0)

        labels = lab_ref[...]                  # (TB, 1) int32
        cls = c_idx * TC + lax.broadcasted_iota(jnp.int32, (TB, TC), 1)
        valid = cls < C                        # mask padded class columns
        is_pos = cls == labels                 # labels < C, so implies `valid`

        # Deliberately un-stabilized exp(D), kept in f32 (feeds log directly).
        expd = jnp.exp(D)
        if exclude_positive:
            include = jnp.logical_and(valid, jnp.logical_not(is_pos))
        else:
            include = valid
        denom_ref[...] += jnp.sum(jnp.where(include, expd, 0.0),
                                  axis=-1, keepdims=True)

        # Fused label-smoothing accumulator: one reduction for sum_c Tsm * D.
        tsm = jnp.where(is_pos, w_pos, jnp.where(valid, w_rest, 0.0))
        tsmd_ref[...] += jnp.sum(tsm * D, axis=-1, keepdims=True)

        @pl.when(c_idx == pl.num_programs(1) - 1)
        def _finalize():
            # loss_i = log(sum_{c in Z} exp(D_ic)) - sum_c Tsm_ic * D_ic
            out_ref[...] = jnp.log(denom_ref[...]) - tsmd_ref[...]

    return kernel


def _pick_tiles(B, C, E):
    """Tile sizes: >= 2 batch tiles when worthwhile (v7x megacore), proxy
    residency when the normalized proxy slab is small, VMEM-aware caps."""
    tb_cap = 128 if E > 2048 else 256
    if B <= 16:
        TB = _round_up(B, 8)
    elif B <= 2 * tb_cap:
        TB = _round_up((B + 1) // 2, 8)      # exactly 2 B-tiles
    else:
        TB = tb_cap

    c128 = _round_up(C, 128)
    stream_tc = 256 if E > 2048 else 512
    # Resident: whole (E, C_pad) proxy slab, double-buffered, stays small.
    resident_ok = (c128 <= 1024) and (2 * c128 * E * 4 <= 4 * 1024 * 1024)
    TC = c128 if (resident_ok or c128 <= stream_tc) else stream_tc
    return TB, TC


def proxynca_unstable_loss(X, T, proxies, smoothing_const=0.0,
                           exclude_positive=False):
    """ProxyNCAUnstable.forward: X (B, E) float, T (B,) int labels, proxies (C, E)."""
    X = X.astype(jnp.float32)
    P = proxies.astype(jnp.float32)
    B, E = X.shape
    C, _ = P.shape

    TB, TC = _pick_tiles(B, C, E)
    B_pad = _round_up(B, TB)
    C_pad = _round_up(C, TC)
    n_bt = B_pad // TB
    n_ct = C_pad // TC

    # One-time O(C*E) XLA pass: normalize, scale by 3, transpose to (E, C_pad)
    # so the kernel's matmul is a plain (TB,E)x(E,TC) MXU feed with no per-step
    # rsqrt and no per-step transpose of the proxy tile.
    Pn = P * (3.0 * lax.rsqrt(jnp.maximum(
        jnp.sum(P * P, axis=-1, keepdims=True), 1e-24)))
    PnT = jnp.pad(Pn.T, ((0, 0), (0, C_pad - C)))            # (E, C_pad)

    Xp = jnp.pad(X, ((0, B_pad - B), (0, 0)))
    lab = jnp.pad(T.astype(jnp.int32), (0, B_pad - B)).reshape(B_pad, 1)

    kernel = _make_proxynca_kernel(C, float(smoothing_const),
                                   bool(exclude_positive), TB, TC)

    # Proxies are HBM-read once when resident (n_ct == 1), else once per B-tile.
    p_reads = 1 if n_ct == 1 else n_bt
    cost = pl.CostEstimate(
        flops=int(2 * B_pad * C_pad * E + 8 * B_pad * C_pad),
        transcendentals=int(B_pad * C_pad + 2 * B_pad),
        bytes_accessed=int(4 * (B_pad * E + p_reads * C_pad * E + 3 * B_pad)),
    )

    per_row = pl.pallas_call(
        kernel,
        out_shape=jax.ShapeDtypeStruct((B_pad, 1), jnp.float32),
        grid_spec=pltpu.PrefetchScalarGridSpec(
            num_scalar_prefetch=0,
            grid=(n_bt, n_ct),
            in_specs=[
                pl.BlockSpec((TB, 1), lambda b, c: (b, 0)),   # labels (int32)
                pl.BlockSpec((TB, E), lambda b, c: (b, 0)),   # X
                pl.BlockSpec((E, TC), lambda b, c: (0, c)),   # proxies^T (prenorm)
            ],
            out_specs=pl.BlockSpec((TB, 1), lambda b, c: (b, 0)),
            scratch_shapes=[
                pltpu.VMEM((TB, E), jnp.float32),   # cached normalized X tile
                pltpu.VMEM((TB, 1), jnp.float32),   # sum_c mask * exp(D)
                pltpu.VMEM((TB, 1), jnp.float32),   # sum_c Tsm * D (fused)
            ],
        ),
        compiler_params=pltpu.CompilerParams(
            dimension_semantics=("parallel", "arbitrary"),
            vmem_limit_bytes=32 * 1024 * 1024),
        cost_estimate=cost,
    )(lab, Xp, PnT)

    # Tiny batch mean over the real rows (padded rows dropped) stays in XLA.
    return jnp.mean(per_row[:B, 0])


def _reference_loss(X, T, proxies, smoothing_const=0.0, exclude_positive=False):
    # Pure-JAX reference mirroring the PyTorch math (unsimplified).
    B, E = X.shape
    C, _ = proxies.shape
    Xn = 3.0 * X / jnp.maximum(jnp.linalg.norm(X, axis=-1, keepdims=True), 1e-12)
    Pn = 3.0 * proxies / jnp.maximum(
        jnp.linalg.norm(proxies, axis=-1, keepdims=True), 1e-12)
    D = (jnp.sum(Xn * Xn, -1, keepdims=True) + jnp.sum(Pn * Pn, -1)[None, :]
         - 2.0 * Xn @ Pn.T)
    D = jnp.maximum(D, 0.0)
    onehot = jax.nn.one_hot(T, C, dtype=jnp.float32)
    mask = (1.0 - onehot) if exclude_positive else jnp.ones((B, C), jnp.float32)
    out = D - jnp.log(jnp.sum(mask * jnp.exp(D), axis=-1, keepdims=True))
    Tsm = onehot * (1.0 - smoothing_const) + (1.0 - onehot) * (
        smoothing_const / (C - 1))
    return jnp.mean(jnp.sum(-Tsm * out, axis=-1))


if __name__ == "__main__":
    key = jax.random.PRNGKey(0)

    # Case 1: module-default small shapes (single tile, resident proxies).
    # Case 2: non-multiple-of-8 batch, smoothing + exclude_positive, resident
    #         proxies, 2 batch tiles (megacore path).
    # Case 3: large class count -> streamed proxy tiles (n_ct > 1) with the
    #         running accumulators exercised.
    cases = [
        dict(B=8, C=8, E=32, smoothing_const=0.0, exclude_positive=False),
        dict(B=36, C=300, E=64, smoothing_const=0.1, exclude_positive=True),
        dict(B=20, C=2500, E=64, smoothing_const=0.05, exclude_positive=False),
    ]

    for i, cfg in enumerate(cases):
        k_x, k_t, k_p, key = jax.random.split(key, 4)
        B, C, E = cfg["B"], cfg["C"], cfg["E"]
        X = jax.random.normal(k_x, (B, E), dtype=jnp.float32)
        T = jax.random.randint(k_t, (B,), 0, C, dtype=jnp.int32)
        # torch.nn.Parameter(torch.randn(nb_classes, sz_embed) / 8)
        proxies = jax.random.normal(k_p, (C, E), dtype=jnp.float32) / 8.0

        loss = proxynca_unstable_loss(
            X, T, proxies, smoothing_const=cfg["smoothing_const"],
            exclude_positive=cfg["exclude_positive"])
        jax.block_until_ready(loss)

        ref = _reference_loss(
            X, T, proxies, smoothing_const=cfg["smoothing_const"],
            exclude_positive=cfg["exclude_positive"])
        assert jnp.isfinite(loss), f"case {i}: loss is not finite"
        assert jnp.allclose(loss, ref, rtol=1e-4, atol=1e-3), (i, loss, ref)

    print("KERNEL_OK")
</pallas_src>

<mosaic_0001>
module attributes {stable_mosaic.version = 11 : i64} {
  func.func @kernel(%arg0: i32, %arg1: i32, %arg2: memref<8x1xi32, #tpu.memory_space<vmem>>, %arg3: memref<8x32xf32, #tpu.memory_space<vmem>>, %arg4: memref<32x128xf32, #tpu.memory_space<vmem>>, %arg5: memref<8x1xf32, #tpu.memory_space<vmem>>, %arg6: memref<8x32xf32, #tpu.memory_space<vmem>>, %arg7: memref<8x1xf32, #tpu.memory_space<vmem>>, %arg8: memref<8x1xf32, #tpu.memory_space<vmem>>) attributes {dimension_semantics = [#tpu.dimension_semantics<parallel>, #tpu.dimension_semantics<arbitrary>], iteration_bounds = array<i64: 1, 1>, scalar_prefetch = 0 : i64, scratch_operands = 3 : i64, tpu.core_type = #tpu.core_type<tc>, window_params = [{transform_indices = @transform_0, window_bounds = array<i64: 8, 1>}, {transform_indices = @transform_1, window_bounds = array<i64: 8, 32>}, {transform_indices = @transform_2, window_bounds = array<i64: 32, 128>}, {transform_indices = @transform_3, window_bounds = array<i64: 8, 1>}]} {
    %c0_i32 = arith.constant 0 : i32
    %0 = arith.cmpi eq, %arg1, %c0_i32 : i32
    %1 = arith.extui %0 : i1 to i32
    %c0_i32_0 = arith.constant 0 : i32
    %2 = arith.cmpi ne, %1, %c0_i32_0 : i32
    scf.if %2 {
      %c0_25 = arith.constant 0 : index
      %c0_26 = arith.constant 0 : index
      %43 = vector.load %arg3[%c0_25, %c0_26] : memref<8x32xf32, #tpu.memory_space<vmem>>, vector<8x32xf32>
      %44 = arith.mulf %43, %43 : vector<8x32xf32>
      %cst_27 = arith.constant dense<0.000000e+00> : vector<8xf32>
      %45 = vector.multi_reduction <add>, %44, %cst_27 [1] : vector<8x32xf32> to vector<8xf32>
      %46 = vector.shape_cast %45 : vector<8xf32> to vector<8x1xf32>
      %cst_28 = arith.constant 1.000000e-24 : f32
      %47 = vector.broadcast %cst_28 : f32 to vector<8x1xf32>
      %48 = arith.maximumf %46, %47 : vector<8x1xf32>
      %49 = math.rsqrt %48 : vector<8x1xf32>
      %cst_29 = arith.constant 3.000000e+00 : f32
      %50 = vector.broadcast %cst_29 : f32 to vector<8x1xf32>
      %51 = arith.mulf %50, %49 : vector<8x1xf32>
      %52 = vector.broadcast %51 : vector<8x1xf32> to vector<8x32xf32>
      %53 = arith.mulf %43, %52 : vector<8x32xf32>
      %c0_30 = arith.constant 0 : index
      %c0_31 = arith.constant 0 : index
      %54 = vector.load %arg6[%c0_30, %c0_31] : memref<8x32xf32, #tpu.memory_space<vmem>>, vector<8x32xf32>
      tpu.vector_store %arg6[%c0_30, %c0_31], %53 {strides = array<i32>} : memref<8x32xf32, #tpu.memory_space<vmem>>, vector<8x32xf32>,
      %cst_32 = arith.constant 0.000000e+00 : f32
      %55 = vector.broadcast %cst_32 : f32 to vector<8x1xf32>
      %c0_33 = arith.constant 0 : index
      %c0_34 = arith.constant 0 : index
      %56 = vector.load %arg7[%c0_33, %c0_34] : memref<8x1xf32, #tpu.memory_space<vmem>>, vector<8x1xf32>
      tpu.vector_store %arg7[%c0_33, %c0_34], %55 {strides = array<i32>} : memref<8x1xf32, #tpu.memory_space<vmem>>, vector<8x1xf32>,
      %cst_35 = arith.constant 0.000000e+00 : f32
      %57 = vector.broadcast %cst_35 : f32 to vector<8x1xf32>
      %c0_36 = arith.constant 0 : index
      %c0_37 = arith.constant 0 : index
      %58 = vector.load %arg8[%c0_36, %c0_37] : memref<8x1xf32, #tpu.memory_space<vmem>>, vector<8x1xf32>
      tpu.vector_store %arg8[%c0_36, %c0_37], %57 {strides = array<i32>} : memref<8x1xf32, #tpu.memory_space<vmem>>, vector<8x1xf32>,
    } else {
    }
    %c0 = arith.constant 0 : index
    %c0_1 = arith.constant 0 : index
    %3 = vector.load %arg6[%c0, %c0_1] : memref<8x32xf32, #tpu.memory_space<vmem>>, vector<8x32xf32>
    %c0_2 = arith.constant 0 : index
    %c0_3 = arith.constant 0 : index
    %4 = vector.load %arg4[%c0_2, %c0_3] : memref<32x128xf32, #tpu.memory_space<vmem>>, vector<32x128xf32>
    %cst = arith.constant dense<0.000000e+00> : vector<8x128xf32>
    %5 = tpu.matmul %3, %4, %cst {dimension_numbers = #tpu.dot_dimension_numbers<[1], [0], [0], [1], [0, 0, 1, 1], [], []>} : vector<8x32xf32>, vector<32x128xf32>, vector<8x128xf32> -> vector<8x128xf32>
    %cst_4 = arith.constant 2.000000e+00 : f32
    %6 = vector.broadcast %cst_4 : f32 to vector<8x128xf32>
    %7 = arith.mulf %6, %5 : vector<8x128xf32>
    %cst_5 = arith.constant 1.800000e+01 : f32
    %8 = vector.broadcast %cst_5 : f32 to vector<8x128xf32>
    %9 = arith.subf %8, %7 : vector<8x128xf32>
    %cst_6 = arith.constant 0.000000e+00 : f32
    %10 = vector.broadcast %cst_6 : f32 to vector<8x128xf32>
    %11 = arith.maximumf %9, %10 : vector<8x128xf32>
    %c0_7 = arith.constant 0 : index
    %c0_8 = arith.constant 0 : index
    %12 = vector.load %arg2[%c0_7, %c0_8] : memref<8x1xi32, #tpu.memory_space<vmem>>, vector<8x1xi32>
    %c128_i32 = arith.constant 128 : i32
    %13 = arith.muli %arg1, %c128_i32 : i32
    %14 = tpu.iota {dimensions = array<i32: 1>} : vector<8x128xi32>
    %15 = vector.broadcast %13 : i32 to vector<8x128xi32>
    %16 = arith.addi %15, %14 : vector<8x128xi32>
    %c8_i32 = arith.constant 8 : i32
    %17 = vector.broadcast %c8_i32 : i32 to vector<8x128xi32>
    %18 = arith.cmpi slt, %16, %17 : vector<8x128xi32>
    %19 = vector.broadcast %12 : vector<8x1xi32> to vector<8x128xi32>
    %20 = arith.cmpi eq, %16, %19 : vector<8x128xi32>
    %21 = math.exp %11 : vector<8x128xf32>
    %c0_9 = arith.constant 0 : index
    %c0_10 = arith.constant 0 : index
    %22 = vector.load %arg7[%c0_9, %c0_10] : memref<8x1xf32, #tpu.memory_space<vmem>>, vector<8x1xf32>
    %cst_11 = arith.constant 0.000000e+00 : f32
    %23 = vector.broadcast %cst_11 : f32 to vector<8x128xf32>
    %24 = arith.select %18, %21, %23 : vector<8x128xi1>, vector<8x128xf32>
    %cst_12 = arith.constant dense<0.000000e+00> : vector<8xf32>
    %25 = vector.multi_reduction <add>, %24, %cst_12 [1] : vector<8x128xf32> to vector<8xf32>
    %26 = vector.shape_cast %25 : vector<8xf32> to vector<8x1xf32>
    %27 = arith.addf %22, %26 : vector<8x1xf32>
    %c0_13 = arith.constant 0 : index
    %c0_14 = arith.constant 0 : index
    %28 = vector.load %arg7[%c0_13, %c0_14] : memref<8x1xf32, #tpu.memory_space<vmem>>, vector<8x1xf32>
    tpu.vector_store %arg7[%c0_13, %c0_14], %27 {strides = array<i32>} : memref<8x1xf32, #tpu.memory_space<vmem>>, vector<8x1xf32>,
    %cst_15 = arith.constant 0.000000e+00 : f32
    %cst_16 = arith.constant 0.000000e+00 : f32
    %29 = vector.broadcast %cst_15 : f32 to vector<8x128xf32>
    %30 = vector.broadcast %cst_16 : f32 to vector<8x128xf32>
    %31 = arith.select %18, %29, %30 : vector<8x128xi1>, vector<8x128xf32>
    %cst_17 = arith.constant 1.000000e+00 : f32
    %32 = vector.broadcast %cst_17 : f32 to vector<8x128xf32>
    %33 = arith.select %20, %32, %31 : vector<8x128xi1>, vector<8x128xf32>
    %c0_18 = arith.constant 0 : index
    %c0_19 = arith.constant 0 : index
    %34 = vector.load %arg8[%c0_18, %c0_19] : memref<8x1xf32, #tpu.memory_space<vmem>>, vector<8x1xf32>
    %35 = arith.mulf %33, %11 : vector<8x128xf32>
    %cst_20 = arith.constant dense<0.000000e+00> : vector<8xf32>
    %36 = vector.multi_reduction <add>, %35, %cst_20 [1] : vector<8x128xf32> to vector<8xf32>
    %37 = vector.shape_cast %36 : vector<8xf32> to vector<8x1xf32>
    %38 = arith.addf %34, %37 : vector<8x1xf32>
    %c0_21 = arith.constant 0 : index
    %c0_22 = arith.constant 0 : index
    %39 = vector.load %arg8[%c0_21, %c0_22] : memref<8x1xf32, #tpu.memory_space<vmem>>, vector<8x1xf32>
    tpu.vector_store %arg8[%c0_21, %c0_22], %38 {strides = array<i32>} : memref<8x1xf32, #tpu.memory_space<vmem>>, vector<8x1xf32>,
    %c0_i32_23 = arith.constant 0 : i32
    %40 = arith.cmpi eq, %arg1, %c0_i32_23 : i32
    %41 = arith.extui %40 : i1 to i32
    %c0_i32_24 = arith.constant 0 : i32
    %42 = arith.cmpi ne, %41, %c0_i32_24 : i32
    scf.if %42 {
      %c0_25 = arith.constant 0 : index
      %c0_26 = arith.constant 0 : index
      %43 = vector.load %arg7[%c0_25, %c0_26] : memref<8x1xf32, #tpu.memory_space<vmem>>, vector<8x1xf32>
      %44 = math.log %43 : vector<8x1xf32>
      %c0_27 = arith.constant 0 : index
      %c0_28 = arith.constant 0 : index
      %45 = vector.load %arg8[%c0_27, %c0_28] : memref<8x1xf32, #tpu.memory_space<vmem>>, vector<8x1xf32>
      %46 = arith.subf %44, %45 : vector<8x1xf32>
      %c0_29 = arith.constant 0 : index
      %c0_30 = arith.constant 0 : index
      %47 = vector.load %arg5[%c0_29, %c0_30] : memref<8x1xf32, #tpu.memory_space<vmem>>, vector<8x1xf32>
      tpu.vector_store %arg5[%c0_29, %c0_30], %46 {strides = array<i32>} : memref<8x1xf32, #tpu.memory_space<vmem>>, vector<8x1xf32>,
    } else {
    }
    return
  }
  func.func @transform_0(%arg0: i32, %arg1: i32) -> (i32, i32) {
    %c0_i32 = arith.constant 0 : i32
    %c0_i32_0 = arith.constant 0 : i32
    return %arg0, %c0_i32 : i32, i32
  }
  func.func @transform_1(%arg0: i32, %arg1: i32) -> (i32, i32) {
    %c0_i32 = arith.constant 0 : i32
    %c0_i32_0 = arith.constant 0 : i32
    return %arg0, %c0_i32 : i32, i32
  }
  func.func @transform_2(%arg0: i32, %arg1: i32) -> (i32, i32) {
    %c0_i32 = arith.constant 0 : i32
    %c0_i32_0 = arith.constant 0 : i32
    return %c0_i32, %arg1 : i32, i32
  }
  func.func @transform_3(%arg0: i32, %arg1: i32) -> (i32, i32) {
    %c0_i32 = arith.constant 0 : i32
    %c0_i32_0 = arith.constant 0 : i32
    return %arg0, %c0_i32 : i32, i32
  }
}

</mosaic_0001>

<llo_original>
// kernel: tpu_custom_call.1
$region0: #{tpu_custom_call.1}
  #allocation0 [shape = 'u32[]', space=smem, size = 0x4, offset = 0x4, fixed_abs, tag = 'smem constant byte address 0x4 - core index']
  #allocation1 [shape = 'u32[144,128]{1,0:T(1,128)}', space=vmem, size = 0x12000, scoped, tag = 'internal scratch']
  #allocation2 [shape = 'f32[8,32]{1,0:T(8,128)}', space=vmem, size = 0x1000, scoped, tag = 'scratch operand']
  #allocation3 [shape = 'f32[8,1]{1,0:T(8,128)}', space=vmem, size = 0x1000, scoped, tag = 'scratch operand']
  #allocation4 [shape = 'f32[8,1]{1,0:T(8,128)}', space=vmem, size = 0x1000, scoped, tag = 'scratch operand']
  %s0 = inlined_call_operand.vmem [shape: s32[8,1], index: 0, kind: input, shape index: {}]
  %s1 = inlined_call_operand.vmem [shape: f32[8,32], index: 1, kind: input, shape index: {}]
  %s2 = inlined_call_operand.hbm [shape: f32[32,128], index: 2, kind: input, shape index: {}]
  %s3 = inlined_call_operand.vmem [shape: f32[8,1], index: 3, kind: output, shape index: {}]
  %s4 = sld [smem:[#allocation0]]
  $region34: #{tpu_custom_call.1} parent=0
    _
  %s6 = ssub.s32 1, %s4
  %s7 = scalar_select 0, %s6, %s4
  $region1: #{tpu_custom_call.1} parent=0
    #allocation5 [shape = 'u8[16384]{0}', space=vmem, size = 0x4000, scoped, tag = 'input window, operand 2, single buffered']
    #allocation6 [shape = 's32[1]{0}', space=sflag, size = 0x4, scoped, tag = 'scoped memory for tpu_custom_call.1']
    %8 = vsyncpa [#allocation6], 0
    // Predicated region
    $region2: #{tpu_custom_call.1} parent=1 // pred_check
      _
    $region3: #{tpu_custom_call.1} parent=1 // pred_check_branch
      %10 = sbr.rel (0) target = $region5
    $region4: #{tpu_custom_call.1} parent=1 // pred_region
      _
    $region5: #{tpu_custom_call.1} parent=1 // pred_fallthru
      _
    // Predicated region
    $region6: #{tpu_custom_call.1} parent=1 // pred_check
      _
    $region7: #{tpu_custom_call.1} parent=1 // pred_check_branch
      %12 = sbr.rel (0) target = $region9
    $region8: #{tpu_custom_call.1} parent=1 // pred_region
      _
    $region9: #{tpu_custom_call.1} parent=1 // pred_fallthru
      _
    // Predicated region
    $region10: #{tpu_custom_call.1} parent=1 // pred_check
      _
    $region11: #{tpu_custom_call.1} parent=1 // pred_check_branch
      %14 = sbr.rel (0) target = $region13
    $region12: #{tpu_custom_call.1} parent=1 // pred_region
      %s16 = ssub.s32 512, 512
      %17 = vsyncadd [#allocation6], %s16
      %s18 = sshll.u32 [#allocation5], 4
      %s19 = int_to_ptr.vmem [resolvable:$true] %s18
      %24 = dma.hbm_to_vmem [thread:$0]  %s2, 512, %s19, [#allocation6], 128, 128, 8
    $region13: #{tpu_custom_call.1} parent=1 // pred_fallthru
      _
    // Predicated region
    $region14: #{tpu_custom_call.1} parent=1 // pred_check
      _
    $region15: #{tpu_custom_call.1} parent=1 // pred_check_branch
      %26 = sbr.rel (0) target = $region17
    $region16: #{tpu_custom_call.1} parent=1 // pred_region
      %27 = dma.done [#allocation6], 512
    $region17: #{tpu_custom_call.1} parent=1 // pred_fallthru
      _
    %p28 = scmp.eq.s32.totalorder 0, 0
    // Predicated region
    $region18: #{tpu_custom_call.1} parent=1 // pred_check
      %p29 = pneg %p28
    $region19: #{tpu_custom_call.1} parent=1 // pred_check_branch
      %31 = sbr.rel (%p29) target = $region21
    $region20: #{tpu_custom_call.1} parent=1 // pred_region
      %v32 = vld [vmem:[%s1] sm:$0xff]
      %v33 = vmul.f32 %v32, %v32
      %vm34 = vcmask 261120
      %v35 = vsel %vm34, %v33, 0.0
      %36 = vadd.xlane.f32.xlu0 %v35
      %v37 = vpop.xlane.xlu0 %36
      %v38 = vmax.f32 %v37, 1e-24
      %v39 = vrsqrt.pop %v38
      %v40 = vmul.f32 %v39, 3.0
      %v41 = vmul.f32 %v32, %v40
      %42 = vst.msk [vmem:[#allocation2] sm:$0xff] %vm34, %v41
      %vm43 = vcmask 7168
      %44 = vst.msk [vmem:[#allocation3] sm:$0xff] %vm43, 0.0
      %45 = vst.msk [vmem:[#allocation4] sm:$0xff] %vm43, 0.0
    $region21: #{tpu_custom_call.1} parent=1 // pred_fallthru
      _
    %v46 = vld [vmem:[#allocation2] sm:$0xff]
    %v47 = vld [vmem:[#allocation5] sm:$0xff]
    %v48 = vld [vmem:[#allocation5 + $0x8] sm:$0xff]
    %v49 = vld [vmem:[#allocation5 + $0x10] sm:$0xff]
    %v50 = vld [vmem:[#allocation5 + $0x18] sm:$0xff]
    %vm51 = vcmask 261120
    %v53 = vsel %vm51, %v46, 0
    %55 = vmatprep.subr.mxu0 0.0
    %56 = vmatpush1.msra.mxu0 %v47
    %57 = vmatprep.subr.mxu0 0.0
    %58 = vmatpush1.msra.mxu0 %v48
    %59 = vmatprep.subr.mxu0 0.0
    %60 = vmatpush1.msra.mxu0 %v49
    %61 = vmatprep.subr.mxu0 0.0
    %62 = vmatpush1.msra.mxu0 %v50
    %63 = vmatprep.subr.mxu0 0.0
    %64 = vmatpush1.msra.mxu0 0.0
    %65 = vmatprep.subr.mxu0 0.0
    %66 = vmatpush1.msra.mxu0 0.0
    %67 = vmatprep.subr.mxu0 0.0
    %68 = vmatpush1.msra.mxu0 0.0
    %69 = vmatprep.subr.mxu0 0.0
    %70 = vmatpush1.msra.mxu0 0.0
    %71 = vmatprep.subr.mxu0 0.0
    %72 = vmatpush1.msra.mxu0 0.0
    %73 = vmatprep.subr.mxu0 0.0
    %74 = vmatpush1.msra.mxu0 0.0
    %75 = vmatprep.subr.mxu0 0.0
    %76 = vmatpush1.msra.mxu0 0.0
    %77 = vmatprep.subr.mxu0 0.0
    %78 = vmatpush1.msra.mxu0 0.0
    %79 = vmatprep.subr.mxu0 0.0
    %80 = vmatpush1.msra.mxu0 0.0
    %81 = vmatprep.subr.mxu0 0.0
    %82 = vmatpush1.msra.mxu0 0.0
    %83 = vmatprep.subr.mxu0 0.0
    %84 = vmatpush1.msra.mxu0 0.0
    %85 = vmatprep.subr.mxu0 0.0
    %86 = vmatpush1.msra.mxu0 0.0
    %87 = vmatprep.subr.mxu0 0.0
    %88 = vmatpush1.msra.mxu0 0.0
    %89 = vmatprep.subr.mxu0 0.0
    %90 = vmatpush1.msra.mxu0 0.0
    %91 = vmatprep.subr.mxu0 0.0
    %92 = vmatpush1.msra.mxu0 0.0
    %93 = vmatprep.subr.mxu0 0.0
    %94 = vmatpush1.msra.mxu0 0.0
    %95 = vmatprep.subr.mxu0 0.0
    %96 = vmatpush1.msra.mxu0 0.0
    %97 = vmatprep.subr.mxu0 0.0
    %98 = vmatpush1.msra.mxu0 0.0
    %99 = vmatprep.subr.mxu0 0.0
    %100 = vmatpush1.msra.mxu0 0.0
    %101 = vmatprep.subr.mxu0 0.0
    %102 = vmatpush1.msra.mxu0 0.0
    %103 = vmatprep.subr.mxu0 0.0
    %104 = vmatpush1.msra.mxu0 0.0
    %105 = vmatprep.subr.mxu0 0.0
    %106 = vmatpush1.msra.mxu0 0.0
    %107 = vmatprep.subr.mxu0 0.0
    %108 = vmatpush1.msra.mxu0 0.0
    %109 = vmatprep.subr.mxu0 0.0
    %110 = vmatpush1.msra.mxu0 0.0
    %111 = vmatprep.subr.mxu0 0.0
    %112 = vmatpush1.msra.mxu0 0.0
    %113 = vmatprep.subr.mxu0 0.0
    %114 = vmatpush1.msra.mxu0 0.0
    %115 = vmatprep.subr.mxu0 0.0
    %116 = vmatpush1.msra.mxu0 0.0
    %117 = vmatprep.subr.mxu0 0.0
    %118 = vmatpush1.msra.mxu0 0.0
    %119 = vmatprep.mubr.f32.mxu0 0.0
    %120 = vmatmul.mubr.f32.gmra.mrb[0].mxu0 %v53
    %v121 = vpop.f32.mrb[0].mxu0
    %v122 = vadd.f32 0.0, %v121
    %v123 = vpop.f32.mrb[0].mxu0
    %124 = vdwg.mxu0
    %v125 = vmul.f32 %v122, 2.0
    %v126 = vsub.f32 18.0, %v125
    %v127 = vmax.f32 %v126, 0.0
    %v128 = vld [vmem:[%s0] sm:$0xff]
    %s129 = smul.u32 0, 128
    %v130 = vlaneseq
    %v131 = vand.u32 %v130, 127
    %v132 = vstv %s129
    %v133 = vadd.s32 %v132, %v131
    %vm134 = vcmp.lt.s32.totalorder %v133, 8
    %135 = vset.pattern.permute.xlu0 0
    %136 = vperm.xlu0 %135, %v128
    %v137 = vpop.permute.xlu0 %136
    %vm138 = vcmp.eq.s32.totalorder %v133, %v137
    %v139 = vmul.f32 %v127, 1.442695
    %v140 = vpow.pop %v139
    %v141 = vld [vmem:[#allocation3] sm:$0xff]
    %v142 = vsel %vm134, %v140, 0.0
    %143 = vadd.xlane.f32.xlu0 %v142
    %v144 = vpop.xlane.xlu0 %143
    %v145 = vadd.f32 %v141, %v144
    %vm146 = vcmask 7168
    %147 = vst.msk [vmem:[#allocation3] sm:$0xff] %vm146, %v145
    %v148 = vsel %vm138, 1.0, 0.0
    %v149 = vld [vmem:[#allocation4] sm:$0xff]
    %v150 = vmul.f32 %v148, %v127
    %151 = vadd.xlane.f32.xlu0 %v150
    %v152 = vpop.xlane.xlu0 %151
    %v153 = vadd.f32 %v149, %v152
    %154 = vst.msk [vmem:[#allocation4] sm:$0xff] %vm146, %v153
    // Predicated region
    $region22: #{tpu_custom_call.1} parent=1 // pred_check
      %p155 = pneg %p28
    $region23: #{tpu_custom_call.1} parent=1 // pred_check_branch
      %157 = sbr.rel (%p155) target = $region25
    $region24: #{tpu_custom_call.1} parent=1 // pred_region
      %v158 = vld [vmem:[#allocation3] sm:$0xff]
      %v159 = vlog2.pop %v158
      %v160 = vmul.f32 %v159, 0.6931472
      %v161 = vld [vmem:[#allocation4] sm:$0xff]
      %v162 = vsub.f32 %v160, %v161
      %163 = vst.msk [vmem:[%s3] sm:$0xff] %vm146, %v162
    $region25: #{tpu_custom_call.1} parent=1 // pred_fallthru
      _
    // Predicated region
    $region26: #{tpu_custom_call.1} parent=1 // pred_check
      _
    $region27: #{tpu_custom_call.1} parent=1 // pred_check_branch
      %165 = sbr.rel (0) target = $region29
    $region28: #{tpu_custom_call.1} parent=1 // pred_region
      _
    $region29: #{tpu_custom_call.1} parent=1 // pred_fallthru
      _
    // Predicated region
    $region30: #{tpu_custom_call.1} parent=1 // pred_check
      _
    $region31: #{tpu_custom_call.1} parent=1 // pred_check_branch
      %167 = sbr.rel (0) target = $region33
    $region32: #{tpu_custom_call.1} parent=1 // pred_region
      _
    $region33: #{tpu_custom_call.1} parent=1 // pred_fallthru
      _
    %168 = vsyncpa [#allocation6], 1

</llo_original>
